<compile_context>
chip_gen: v7x
topology: tpu7x:2x2x1
jax: 0.10.0
libtpu: 0.0.40
codegen_flags: <defaults>
</compile_context>

<pallas_src>
import functools

import jax
import jax.numpy as jnp
from jax.experimental import pallas as pl
from jax.experimental.pallas import tpu as pltpu


def _round_up(x, m):
    return (x + m - 1) // m * m


def _vmem_budget_bytes():
    """Per-generation VMEM target with headroom for Mosaic scratch/semaphores."""
    cap = 64 << 20
    try:
        info = pltpu.get_tpu_info()
        cap = int(getattr(info, "vmem_capacity_bytes", cap))
    except Exception:
        pass
    if cap > (64 << 20):
        return 96 << 20   # v5e / v6e: 128 MiB physical -> use most of it
    return 48 << 20       # v7x-class: 64 MiB per TC -> leave scratch headroom


def _choose_block_b(B, C, D, s_item, f_item, row_align, budget):
    """Pick rows-per-grid-step from (C + D) and the VMEM budget."""
    # Double-buffered input tiles (scores + feats + int32 labels) ...
    per_row_inputs = 2 * (C * s_item + D * f_item + 4)
    # ... plus f32 compute intermediates (scores cast / e, e*e, feats cast).
    per_row_compute = 4 * (2 * C + D)
    per_row = per_row_inputs + per_row_compute
    headroom = max(budget - (2 << 20), per_row * row_align)

    bb = (headroom // per_row) // row_align * row_align
    bb = max(row_align, min(bb, 4096))          # keep DMAs long but tiles sane
    if B > row_align:
        # Ensure >= 2 grid steps when B allows, so v7x's two TCs both get work
        # (dimension_semantics=("parallel",) shards the batch grid).
        bb = min(bb, _round_up(-(-B // 2), row_align))
    bb = min(bb, _round_up(B, row_align))
    return max(row_align, bb)


def _sgm_loss_partial_kernel(feats_ref, scores_ref, labels_ref, out_ref,
                             *, batch, block_b):
    """One batch tile -> one scalar partial sum of pereg_wt * sqrXnorm."""
    i = pl.program_id(0)

    scores = scores_ref[...].astype(jnp.float32)          # (bb, C)
    feats = feats_ref[...].astype(jnp.float32)            # (bb, D)
    labels = labels_ref[...]                               # (bb, 1) int32

    bb, c = scores.shape

    # Numerically stable softmax pieces; never materialize p = e / denom.
    m = jnp.max(scores, axis=1, keepdims=True)             # (bb, 1)
    e = jnp.exp(scores - m)                                 # (bb, C)  (EUP)
    denom = jnp.sum(e, axis=1, keepdims=True)               # (bb, 1)
    r = 1.0 / denom                                         # exact reciprocal

    # e_y = e at the label column, via where-select (no one_hot cast/multiply).
    cls_ids = jax.lax.broadcasted_iota(jnp.int32, (bb, c), 1)
    e_y = jnp.sum(jnp.where(cls_ids == labels, e, 0.0), axis=1, keepdims=True)
    s2 = jnp.sum(e * e, axis=1, keepdims=True)               # (bb, 1)

    # sum((one_hot - p)^2) = 1 - 2*p_y + sum(p^2);  p_y = e_y*r, sum(p^2) = s2*r^2
    pereg_wt = 1.0 - 2.0 * (e_y * r) + s2 * (r * r)          # (bb, 1)
    sqr_x_norm = jnp.sum(feats * feats, axis=1, keepdims=True)  # (bb, 1)

    # Ragged tail: select (not multiply) on the global row id so garbage / NaN
    # in out-of-bounds rows of the last tile never propagates.
    row_ids = i * block_b + jax.lax.broadcasted_iota(jnp.int32, (bb, 1), 0)
    contrib = jnp.where(row_ids < batch, pereg_wt * sqr_x_norm, 0.0)

    partial = jnp.sum(contrib)                               # scalar for this tile
    out_ref[...] = jnp.broadcast_to(partial, out_ref.shape).astype(jnp.float32)


def sgm_loss(feats, scores, classifier_weight, labels, num_classes):
    """Pallas TPU implementation of SGMLoss.forward.

    feats:             (B, D) float
    scores:            (B, C) float, C == num_classes
    classifier_weight: unused (kept for signature parity with the nn.Module)
    labels:            (B,) int
    """
    del classifier_weight  # not used in the PyTorch forward either
    B, D = feats.shape
    B2, C = scores.shape
    assert B2 == B and C == num_classes

    # Sublane alignment for the second-to-last (batch) block dim.
    row_align = 16 if (feats.dtype.itemsize < 4 or scores.dtype.itemsize < 4) else 8

    budget = _vmem_budget_bytes()
    bb = _choose_block_b(B, C, D, scores.dtype.itemsize, feats.dtype.itemsize,
                         row_align, budget)
    num_blocks = pl.cdiv(B, bb)

    labels2d = labels.astype(jnp.int32).reshape(-1, 1)       # (B, 1)

    compiler_params = pltpu.CompilerParams(
        dimension_semantics=("parallel",),  # megacore-shard the batch grid
        vmem_limit_bytes=int(budget),
    )

    cost = pl.CostEstimate(
        flops=int(B * (6 * C + 2 * D)),
        transcendentals=int(B * C),
        bytes_accessed=int(
            B * C * scores.dtype.itemsize
            + B * D * feats.dtype.itemsize
            + B * 4
            + num_blocks * 8 * 128 * 4
        ),
    )

    kernel = functools.partial(_sgm_loss_partial_kernel, batch=B, block_b=bb)

    partials = pl.pallas_call(
        kernel,
        out_shape=jax.ShapeDtypeStruct((num_blocks, 8, 128), jnp.float32),
        grid=(num_blocks,),
        in_specs=[
            pl.BlockSpec((bb, D), lambda i: (i, 0)),   # feats tile (full D extent)
            pl.BlockSpec((bb, C), lambda i: (i, 0)),   # scores tile (full C extent)
            pl.BlockSpec((bb, 1), lambda i: (i, 0)),   # labels tile
        ],
        out_specs=pl.BlockSpec((1, 8, 128), lambda i: (i, 0, 0)),
        compiler_params=compiler_params,
        cost_estimate=cost,
    )(feats, scores, labels2d)

    # Mean over the original batch size (masked tail rows contribute exactly 0).
    return jnp.sum(partials[:, 0, 0]) / jnp.float32(B)


if __name__ == "__main__":
    B, C, D = 8, 16, 32  # batch, num_classes, feature dim

    key = jax.random.PRNGKey(0)
    k_feats, k_scores, k_w, k_labels = jax.random.split(key, 4)

    feats = jax.random.normal(k_feats, (B, D), dtype=jnp.float32)
    scores = jax.random.normal(k_scores, (B, C), dtype=jnp.float32)
    classifier_weight = jax.random.normal(k_w, (C, D), dtype=jnp.float32)
    labels = jax.random.randint(k_labels, (B,), 0, C, dtype=jnp.int32)

    loss = sgm_loss(feats, scores, classifier_weight, labels, num_classes=C)
    loss = jax.block_until_ready(loss)

    # Pure-JAX reference for sanity.
    p_ref = jax.nn.softmax(scores, axis=1)
    one_hot_ref = jax.nn.one_hot(labels, C, dtype=jnp.float32)
    loss_ref = jnp.mean(
        jnp.sum((one_hot_ref - p_ref) ** 2, axis=1) * jnp.sum(feats ** 2, axis=1)
    )
    assert jnp.allclose(loss, loss_ref, rtol=1e-5, atol=1e-5), (loss, loss_ref)

    print("KERNEL_OK")
</pallas_src>

<mosaic_0001>
module attributes {stable_mosaic.version = 11 : i64} {
  func.func @_sgm_loss_partial_kernel(%arg0: i32, %arg1: memref<8x32xf32, #tpu.memory_space<vmem>>, %arg2: memref<8x16xf32, #tpu.memory_space<vmem>>, %arg3: memref<8x1xi32, #tpu.memory_space<vmem>>, %arg4: memref<1x8x128xf32, #tpu.memory_space<vmem>>) attributes {dimension_semantics = [#tpu.dimension_semantics<parallel>], iteration_bounds = array<i64: 1>, scalar_prefetch = 0 : i64, scratch_operands = 0 : i64, tpu.core_type = #tpu.core_type<tc>, window_params = [{transform_indices = @transform_0, window_bounds = array<i64: 8, 32>}, {transform_indices = @transform_1, window_bounds = array<i64: 8, 16>}, {transform_indices = @transform_2, window_bounds = array<i64: 8, 1>}, {transform_indices = @transform_3, window_bounds = array<i64: 1, 8, 128>}]} {
    %c0 = arith.constant 0 : index
    %c0_0 = arith.constant 0 : index
    %0 = vector.load %arg2[%c0, %c0_0] : memref<8x16xf32, #tpu.memory_space<vmem>>, vector<8x16xf32>
    %c0_1 = arith.constant 0 : index
    %c0_2 = arith.constant 0 : index
    %1 = vector.load %arg1[%c0_1, %c0_2] : memref<8x32xf32, #tpu.memory_space<vmem>>, vector<8x32xf32>
    %c0_3 = arith.constant 0 : index
    %c0_4 = arith.constant 0 : index
    %2 = vector.load %arg3[%c0_3, %c0_4] : memref<8x1xi32, #tpu.memory_space<vmem>>, vector<8x1xi32>
    %cst = arith.constant dense<0xFF800000> : vector<8xf32>
    %3 = vector.multi_reduction <maximumf>, %0, %cst [1] : vector<8x16xf32> to vector<8xf32>
    %4 = vector.shape_cast %3 : vector<8xf32> to vector<8x1xf32>
    %5 = vector.broadcast %4 : vector<8x1xf32> to vector<8x16xf32>
    %6 = arith.subf %0, %5 : vector<8x16xf32>
    %7 = math.exp %6 : vector<8x16xf32>
    %cst_5 = arith.constant dense<0.000000e+00> : vector<8xf32>
    %8 = vector.multi_reduction <add>, %7, %cst_5 [1] : vector<8x16xf32> to vector<8xf32>
    %9 = vector.shape_cast %8 : vector<8xf32> to vector<8x1xf32>
    %cst_6 = arith.constant 1.000000e+00 : f32
    %10 = vector.broadcast %cst_6 : f32 to vector<8x1xf32>
    %11 = arith.divf %10, %9 : vector<8x1xf32>
    %12 = tpu.iota {dimensions = array<i32: 1>} : vector<8x16xi32>
    %13 = vector.broadcast %2 : vector<8x1xi32> to vector<8x16xi32>
    %14 = arith.cmpi eq, %12, %13 : vector<8x16xi32>
    %cst_7 = arith.constant 0.000000e+00 : f32
    %15 = vector.broadcast %cst_7 : f32 to vector<8x16xf32>
    %16 = arith.select %14, %7, %15 : vector<8x16xi1>, vector<8x16xf32>
    %cst_8 = arith.constant dense<0.000000e+00> : vector<8xf32>
    %17 = vector.multi_reduction <add>, %16, %cst_8 [1] : vector<8x16xf32> to vector<8xf32>
    %18 = vector.shape_cast %17 : vector<8xf32> to vector<8x1xf32>
    %19 = arith.mulf %7, %7 : vector<8x16xf32>
    %cst_9 = arith.constant dense<0.000000e+00> : vector<8xf32>
    %20 = vector.multi_reduction <add>, %19, %cst_9 [1] : vector<8x16xf32> to vector<8xf32>
    %21 = vector.shape_cast %20 : vector<8xf32> to vector<8x1xf32>
    %22 = arith.mulf %18, %11 : vector<8x1xf32>
    %cst_10 = arith.constant 2.000000e+00 : f32
    %23 = vector.broadcast %cst_10 : f32 to vector<8x1xf32>
    %24 = arith.mulf %23, %22 : vector<8x1xf32>
    %cst_11 = arith.constant 1.000000e+00 : f32
    %25 = vector.broadcast %cst_11 : f32 to vector<8x1xf32>
    %26 = arith.subf %25, %24 : vector<8x1xf32>
    %27 = arith.mulf %11, %11 : vector<8x1xf32>
    %28 = arith.mulf %21, %27 : vector<8x1xf32>
    %29 = arith.addf %26, %28 : vector<8x1xf32>
    %30 = arith.mulf %1, %1 : vector<8x32xf32>
    %cst_12 = arith.constant dense<0.000000e+00> : vector<8xf32>
    %31 = vector.multi_reduction <add>, %30, %cst_12 [1] : vector<8x32xf32> to vector<8xf32>
    %32 = vector.shape_cast %31 : vector<8xf32> to vector<8x1xf32>
    %c8_i32 = arith.constant 8 : i32
    %33 = arith.muli %arg0, %c8_i32 : i32
    %34 = tpu.iota {dimensions = array<i32: 0>} : vector<8x1xi32>
    %35 = vector.broadcast %33 : i32 to vector<8x1xi32>
    %36 = arith.addi %35, %34 : vector<8x1xi32>
    %c8_i32_13 = arith.constant 8 : i32
    %37 = vector.broadcast %c8_i32_13 : i32 to vector<8x1xi32>
    %38 = arith.cmpi slt, %36, %37 : vector<8x1xi32>
    %39 = arith.mulf %29, %32 : vector<8x1xf32>
    %cst_14 = arith.constant 0.000000e+00 : f32
    %40 = vector.broadcast %cst_14 : f32 to vector<8x1xf32>
    %41 = arith.select %38, %39, %40 : vector<8x1xi1>, vector<8x1xf32>
    %42 = vector.shape_cast %41 : vector<8x1xf32> to vector<1x8x1xf32>
    %cst_15 = arith.constant dense<0.000000e+00> : vector<1xf32>
    %43 = vector.multi_reduction <add>, %42, %cst_15 [1, 2] : vector<1x8x1xf32> to vector<1xf32>
    %44 = vector.shape_cast %43 : vector<1xf32> to vector<1x1x1xf32>
    %45 = vector.extract %44[0, 0, 0] : f32 from vector<1x1x1xf32>
    %46 = vector.broadcast %45 : f32 to vector<1x8x128xf32>
    %c0_16 = arith.constant 0 : index
    %c0_17 = arith.constant 0 : index
    %c0_18 = arith.constant 0 : index
    %47 = vector.load %arg4[%c0_16, %c0_17, %c0_18] : memref<1x8x128xf32, #tpu.memory_space<vmem>>, vector<1x8x128xf32>
    tpu.vector_store %arg4[%c0_16, %c0_17, %c0_18], %46 {strides = array<i32>} : memref<1x8x128xf32, #tpu.memory_space<vmem>>, vector<1x8x128xf32>,
    return
  }
  func.func @transform_0(%arg0: i32) -> (i32, i32) {
    %c0_i32 = arith.constant 0 : i32
    %c0_i32_0 = arith.constant 0 : i32
    return %arg0, %c0_i32 : i32, i32
  }
  func.func @transform_1(%arg0: i32) -> (i32, i32) {
    %c0_i32 = arith.constant 0 : i32
    %c0_i32_0 = arith.constant 0 : i32
    return %arg0, %c0_i32 : i32, i32
  }
  func.func @transform_2(%arg0: i32) -> (i32, i32) {
    %c0_i32 = arith.constant 0 : i32
    %c0_i32_0 = arith.constant 0 : i32
    return %arg0, %c0_i32 : i32, i32
  }
  func.func @transform_3(%arg0: i32) -> (i32, i32, i32) {
    %c0_i32 = arith.constant 0 : i32
    %c0_i32_0 = arith.constant 0 : i32
    %c0_i32_1 = arith.constant 0 : i32
    return %arg0, %c0_i32, %c0_i32_0 : i32, i32, i32
  }
}

</mosaic_0001>

<llo_original>
// kernel: tpu_custom_call.1
$region0: #{tpu_custom_call.1}
  #allocation0 [shape = 'u32[]', space=smem, size = 0x4, offset = 0x4, fixed_abs, tag = 'smem constant byte address 0x4 - core index']
  #allocation1 [shape = 'u32[144,128]{1,0:T(1,128)}', space=vmem, size = 0x12000, scoped, tag = 'internal scratch']
  %s0 = inlined_call_operand.vmem [shape: f32[8,32], index: 0, kind: input, shape index: {}]
  %s1 = inlined_call_operand.hbm [shape: f32[8,16], index: 1, kind: input, shape index: {}]
  %s2 = inlined_call_operand.vmem [shape: s32[8,1], index: 2, kind: input, shape index: {}]
  %s3 = inlined_call_operand.hbm [shape: f32[1,8,128], index: 3, kind: output, shape index: {}]
  %s4 = sld [smem:[#allocation0]]
  $region26: #{tpu_custom_call.1} parent=0
    _
  %s6 = ssub.s32 1, %s4
  %s7 = scalar_select 0, %s6, %s4
  $region1: #{tpu_custom_call.1} parent=0
    #allocation2 [shape = 'u8[4096]{0}', space=vmem, size = 0x1000, scoped, tag = 'input window, operand 1, single buffered']
    #allocation3 [shape = 's32[1]{0}', space=sflag, size = 0x4, scoped, tag = 'scoped memory for tpu_custom_call.1']
    #allocation4 [shape = 's32[1]{0}', space=sflag, size = 0x4, scoped, tag = 'scoped memory for tpu_custom_call.1']
    #allocation5 [shape = 'u8[4096]{0}', space=vmem, size = 0x1000, scoped, tag = 'output window, operand 0, single buffered']
    %8 = vsyncpa [#allocation3], 0
    %9 = vsyncpa [#allocation4], 0
    // Predicated region
    $region2: #{tpu_custom_call.1} parent=1 // pred_check
      _
    $region3: #{tpu_custom_call.1} parent=1 // pred_check_branch
      %11 = sbr.rel (0) target = $region5
    $region4: #{tpu_custom_call.1} parent=1 // pred_region
      _
    $region5: #{tpu_custom_call.1} parent=1 // pred_fallthru
      _
    // Predicated region
    $region6: #{tpu_custom_call.1} parent=1 // pred_check
      _
    $region7: #{tpu_custom_call.1} parent=1 // pred_check_branch
      %13 = sbr.rel (0) target = $region9
    $region8: #{tpu_custom_call.1} parent=1 // pred_region
      %s15 = ssub.s32 128, 128
      %16 = vsyncadd [#allocation3], %s15
      %s18 = sshll.u32 [#allocation2], 4
      %s19 = int_to_ptr.vmem [resolvable:$true] %s18
      %21 = dma.hbm_to_vmem [thread:$0]  %s1, 128, %s19, [#allocation3]
    $region9: #{tpu_custom_call.1} parent=1 // pred_fallthru
      _
    // Predicated region
    $region10: #{tpu_custom_call.1} parent=1 // pred_check
      _
    $region11: #{tpu_custom_call.1} parent=1 // pred_check_branch
      %23 = sbr.rel (0) target = $region13
    $region12: #{tpu_custom_call.1} parent=1 // pred_region
      _
    $region13: #{tpu_custom_call.1} parent=1 // pred_fallthru
      _
    // Predicated region
    $region14: #{tpu_custom_call.1} parent=1 // pred_check
      _
    $region15: #{tpu_custom_call.1} parent=1 // pred_check_branch
      %25 = sbr.rel (0) target = $region17
    $region16: #{tpu_custom_call.1} parent=1 // pred_region
      %26 = dma.done [#allocation3], 128
    $region17: #{tpu_custom_call.1} parent=1 // pred_fallthru
      _
    %v27 = vld [vmem:[#allocation2] sm:$0xff]
    %v28 = vld [vmem:[%s0] sm:$0xff]
    %v29 = vld [vmem:[%s2] sm:$0xff]
    %vm30 = vcmask 130048
    %v31 = vsel %vm30, %v27, -inf
    %32 = vmax.xlane.f32.xlu0 %v31
    %v33 = vpop.xlane.xlu0 %32
    %v34 = vsub.f32 %v27, %v33
    %v35 = vmul.f32 %v34, 1.442695
    %v36 = vpow.pop %v35
    %v37 = vsel %vm30, %v36, 0.0
    %38 = vadd.xlane.f32.xlu0 %v37
    %v39 = vpop.xlane.xlu0 %38
    %v40 = vrcp.pop %v39
    %v41 = vmul.f32 1.0, %v40
    %v42 = vlaneseq
    %v43 = vand.u32 %v42, 127
    %44 = vset.pattern.permute.xlu0 0
    %45 = vperm.xlu0 %44, %v29
    %v46 = vpop.permute.xlu0 %45
    %vm47 = vcmp.eq.s32.totalorder %v43, %v46
    %v48 = vsel %vm47, %v36, 0.0
    %v49 = vsel %vm30, %v48, 0.0
    %50 = vadd.xlane.f32.xlu0 %v49
    %v51 = vpop.xlane.xlu0 %50
    %v52 = vmul.f32 %v36, %v36
    %v53 = vsel %vm30, %v52, 0.0
    %54 = vadd.xlane.f32.xlu0 %v53
    %v55 = vpop.xlane.xlu0 %54
    %v56 = vmul.f32 %v51, %v41
    %v57 = vmul.f32 %v56, 2.0
    %v58 = vsub.f32 1.0, %v57
    %v59 = vmul.f32 %v41, %v41
    %v60 = vmul.f32 %v55, %v59
    %v61 = vadd.f32 %v58, %v60
    %v62 = vmul.f32 %v28, %v28
    %vm63 = vcmask 261120
    %v64 = vsel %vm63, %v62, 0.0
    %65 = vadd.xlane.f32.xlu0 %v64
    %v66 = vpop.xlane.xlu0 %65
    %s67 = smul.u32 0, 8
    %v68 = vlaneseq
    %v69 = vshrl.u32 %v68, 7
    %v70 = vstv %s67
    %v71 = vadd.s32 %v70, %v69
    %vm72 = vcmp.lt.s32.totalorder %v71, 8
    %v73 = vmul.f32 %v61, %v66
    %v74 = vsel %vm72, %v73, 0.0
    %vm75 = vcmask 7168
    %v76 = vsel %vm75, %v74, 0.0
    %77 = vadd.xlane.f32.xlu0 %v76
    %v78 = vpop.xlane.xlu0 %77
    %v79 = vrot.slane %v78, 4
    %v80 = vadd.f32 %v78, %v79
    %v81 = vrot.slane %v80, 2
    %v82 = vadd.f32 %v80, %v81
    %v83 = vrot.slane %v82, 1
    %v84 = vadd.f32 %v82, %v83
    %s85 = vtos %v84
    %v86 = vstv %s85
    %87 = vst [vmem:[#allocation5] sm:$0xff] %v86
    // Predicated region
    $region18: #{tpu_custom_call.1} parent=1 // pred_check
      _
    $region19: #{tpu_custom_call.1} parent=1 // pred_check_branch
      %89 = sbr.rel (0) target = $region21
    $region20: #{tpu_custom_call.1} parent=1 // pred_region
      %s91 = ssub.s32 128, 128
      %92 = vsyncadd [#allocation4], %s91
      %s94 = sshll.u32 [#allocation5], 4
      %s95 = int_to_ptr.vmem [resolvable:$true] %s94
      %97 = dma.vmem_to_hbm [thread:$0]  %s95, 128, %s3, [#allocation4]
    $region21: #{tpu_custom_call.1} parent=1 // pred_fallthru
      _
    // Predicated region
    $region22: #{tpu_custom_call.1} parent=1 // pred_check
      _
    $region23: #{tpu_custom_call.1} parent=1 // pred_check_branch
      %99 = sbr.rel (0) target = $region25
    $region24: #{tpu_custom_call.1} parent=1 // pred_region
      %100 = dma.done [#allocation4], 128
    $region25: #{tpu_custom_call.1} parent=1 // pred_fallthru
      _
    %101 = vsyncpa [#allocation3], 1
    %102 = vsyncpa [#allocation4], 1

</llo_original>
